<compile_context>
chip_gen: v7x
topology: tpu7x:2x2x1
jax: 0.10.0
libtpu: 0.0.40
codegen_flags: <defaults>
</compile_context>

<pallas_src>
import functools

import jax
import jax.numpy as jnp
from jax import lax
from jax.experimental import pallas as pl
from jax.experimental.pallas import tpu as pltpu

BN_EPS = 1e-5
LANE = 128
SUBLANE = 8
VMEM_BUDGET_BYTES = 40 * 1024 * 1024   # resident-slab cap (safe on v7x 64 MiB)
VMEM_LIMIT_BYTES = 48 * 1024 * 1024


def _round_up(n, m):
    return ((n + m - 1) // m) * m


# ---------------------------------------------------------------------------
# Fused kernel: the whole Actor forward in one pallas_call.
#   inputs : x (Bp, Fp) f32, w_stack (L, Fp, Fp) bf16, b_stack (L, 1, Fp) f32
#   output : (Bp, Fp) f32 (final tanh activations, valid in [:b, :out_size])
#   scratch: act slab (Bp, Fp) f32, resident between layers.
# ---------------------------------------------------------------------------
def _fused_actor_kernel(x_ref, w_ref, b_ref, o_ref, act_ref, *,
                        n_layers, n_rows, tm, n_tiles, n_pad):
    fp = act_ref.shape[-1]
    inv_n = jnp.float32(1.0 / n_rows)
    unroll = n_tiles <= 8

    for l in range(n_layers):
        src = x_ref if l == 0 else act_ref     # layer 0 reads the input directly
        is_last = (l == n_layers - 1)
        dst = o_ref if is_last else act_ref    # in-place update of the slab
        w = w_ref[l]                           # (Fp, Fp) bf16, gamma folded in
        b = b_ref[l]                           # (1, Fp) f32, beta @ W + bias

        # ---- pass 1: per-feature mean (padded rows are exactly zero) ------
        def sum_body(i, acc, src=src):
            r0 = pl.multiple_of(i * tm, tm)
            xt = src[pl.ds(r0, tm), :].astype(jnp.float32)
            return acc + jnp.sum(xt, axis=0, keepdims=True)

        total = lax.fori_loop(0, n_tiles, sum_body,
                              jnp.zeros((1, fp), jnp.float32), unroll=unroll)
        mean = total * inv_n

        # ---- pass 2: centered variance (no E[x^2]-mean^2 cancellation) ----
        def var_body(i, acc, src=src, mean=mean):
            r0 = pl.multiple_of(i * tm, tm)
            d = src[pl.ds(r0, tm), :].astype(jnp.float32) - mean
            return acc + jnp.sum(d * d, axis=0, keepdims=True)

        ssq = lax.fori_loop(0, n_tiles, var_body,
                            jnp.zeros((1, fp), jnp.float32), unroll=unroll)
        var = ssq * inv_n
        if n_pad:
            # each zero-padded row contributed mean**2; remove analytically.
            var = var - (jnp.float32(n_pad) * inv_n) * (mean * mean)
        var = jnp.maximum(var, 0.0)
        inv_std = lax.rsqrt(var + jnp.float32(BN_EPS))   # EUP slot, once/layer
        shift = -mean * inv_std                          # BN -> x*scale + shift

        # ---- pass 3: normalize + bf16 MXU matmul (f32 acc) + activation ---
        def apply_body(i, carry, src=src, dst=dst, w=w, b=b,
                       inv_std=inv_std, shift=shift, is_last=is_last):
            r0 = pl.multiple_of(i * tm, tm)
            xt = src[pl.ds(r0, tm), :].astype(jnp.float32)
            xn = xt * inv_std + shift
            y = jnp.dot(xn.astype(jnp.bfloat16), w,
                        preferred_element_type=jnp.float32) + b
            if is_last:
                y = jnp.tanh(y)
            else:
                y = jnp.maximum(y, 0.0)
                if n_pad:
                    # keep padded rows at exactly 0 for the next layer's stats
                    rows = lax.broadcasted_iota(jnp.int32, (tm, 1), 0) + r0
                    y = jnp.where(rows < n_rows, y, 0.0)
            dst[pl.ds(r0, tm), :] = y.astype(dst.dtype)
            return carry

        lax.fori_loop(0, n_tiles, apply_body, 0, unroll=unroll)


# ---------------------------------------------------------------------------
# One-time parameter prep (outside the jitted per-call path, per review):
# fold BN gamma/beta into the Linear weight/bias, pad to a common 128-multiple
# feature width, stack per-layer tensors, cast weights to bf16.
# ---------------------------------------------------------------------------
def prepare_actor_params(params):
    dims = [params[0]["w"].shape[0]] + [layer["w"].shape[1] for layer in params]
    fp = _round_up(max(dims), LANE)
    w_stack, b_stack = [], []
    for layer in params:
        w = layer["w"].astype(jnp.float32)                # (fin, fout) = torch_w.T
        fin, fout = w.shape
        gamma = layer["gamma"].astype(jnp.float32)
        beta = layer["beta"].astype(jnp.float32)
        bias = layer["bias"].astype(jnp.float32)

        w_fold = gamma[:, None] * w                       # fold BN gamma into rows
        b_fold = beta @ w + bias                          # fold BN beta into bias

        w_pad = jnp.zeros((fp, fp), jnp.float32).at[:fin, :fout].set(w_fold)
        b_pad = jnp.zeros((1, fp), jnp.float32).at[0, :fout].set(b_fold)
        w_stack.append(w_pad)
        b_stack.append(b_pad)
    return dict(
        w=jnp.stack(w_stack).astype(jnp.bfloat16),        # (L, Fp, Fp) bf16
        b=jnp.stack(b_stack),                             # (L, 1, Fp) f32
        fp=fp, in_size=dims[0], out_size=dims[-1], n_layers=len(params))


def actor_forward_fused(x, prepared, *, tm=None):
    """x: (batch, state_size) float32 -> (batch, output_size) float32."""
    n_layers = prepared["n_layers"]
    fp = prepared["fp"]
    b, f0 = x.shape

    if tm is None:
        # whole batch as one tile up to 1024 rows, else 1024-row tiles
        tm = _round_up(b, SUBLANE) if b <= 1024 else 1024
    tm = _round_up(tm, SUBLANE)
    bp = _round_up(b, tm)
    n_tiles = bp // tm
    n_pad = bp - b

    # VMEM budget: padded input + output + resident slab (f32) + weights/bias.
    slab_bytes = bp * fp * 4
    need = 3 * slab_bytes + prepared["w"].size * 2 + prepared["b"].size * 4
    if need > VMEM_BUDGET_BYTES:
        raise NotImplementedError(
            f"fused Actor kernel needs ~{need >> 20} MiB VMEM "
            f"(budget {VMEM_BUDGET_BYTES >> 20} MiB); split the batch across "
            "calls or add an HBM-tiled outer grid with partial BN stats.")

    x_pad = jnp.pad(x.astype(jnp.float32), ((0, bp - b), (0, fp - f0)))

    kernel = functools.partial(
        _fused_actor_kernel, n_layers=n_layers, n_rows=b, tm=tm,
        n_tiles=n_tiles, n_pad=n_pad)

    out = pl.pallas_call(
        kernel,
        out_shape=jax.ShapeDtypeStruct((bp, fp), jnp.float32),
        in_specs=[pl.BlockSpec(memory_space=pltpu.MemorySpace.VMEM)] * 3,
        out_specs=pl.BlockSpec(memory_space=pltpu.MemorySpace.VMEM),
        scratch_shapes=[pltpu.VMEM((bp, fp), jnp.float32)],
        compiler_params=pltpu.CompilerParams(vmem_limit_bytes=VMEM_LIMIT_BYTES),
    )(x_pad, prepared["w"], prepared["b"])

    return out[:b, :prepared["out_size"]]


def make_actor_forward(params, *, tm=None):
    """Prep params once (not per call), return a jitted forward fn."""
    prepared = prepare_actor_params(params)

    @jax.jit
    def fwd(x):
        return actor_forward_fused(x, prepared, tm=tm)

    return fwd


# ---------------------------------------------------------------------------
# Init mirroring the PyTorch module's reset_parameters(), and a f32 reference.
# ---------------------------------------------------------------------------
def init_actor_params(key, state_size, output_size, fc_layer_sizes):
    sizes = [state_size] + list(fc_layer_sizes) + [output_size]
    params = []
    n_layers = len(sizes) - 1
    for i in range(n_layers):
        fin, fout = sizes[i], sizes[i + 1]
        key, kw, kb = jax.random.split(key, 3)
        if i < n_layers - 1:
            lim = 1.0 / jnp.sqrt(jnp.float32(fout))       # hidden_init: fan_in = weight.size(0) = out
        else:
            lim = jnp.float32(0.003)
        w = jax.random.uniform(kw, (fin, fout), jnp.float32, -lim, lim)
        blim = 1.0 / jnp.sqrt(jnp.float32(fin))           # nn.Linear default bias init
        bias = jax.random.uniform(kb, (fout,), jnp.float32, -blim, blim)
        params.append(dict(
            gamma=jnp.ones((fin,), jnp.float32),
            beta=jnp.zeros((fin,), jnp.float32),
            w=w,
            bias=bias))
    return params


def actor_forward_ref(x, params):
    """Pure-JAX f32 reference (training-mode BatchNorm semantics)."""
    n_layers = len(params)
    for i, layer in enumerate(params):
        mean = jnp.mean(x, axis=0, keepdims=True)
        var = jnp.mean((x - mean) ** 2, axis=0, keepdims=True)
        xn = (x - mean) / jnp.sqrt(var + BN_EPS)
        xn = xn * layer["gamma"] + layer["beta"]
        y = xn @ layer["w"] + layer["bias"]
        x = jnp.maximum(y, 0.0) if i < n_layers - 1 else jnp.tanh(y)
    return x


# TODO(synk): BatchNorm1d running_mean/running_var buffer updates (a training
# side effect that does not change the forward output) are not materialized.

if __name__ == "__main__":
    state_size = 32
    output_size = 8
    fc_layer_sizes = [64, 64]
    batch = 64          # small demo batch; BN training-mode stats need > 1 row

    key = jax.random.PRNGKey(0)
    kx, kp = jax.random.split(key)
    x = jax.random.normal(kx, (batch, state_size), jnp.float32)
    params = init_actor_params(kp, state_size, output_size, fc_layer_sizes)

    fwd = make_actor_forward(params)
    out = jax.block_until_ready(fwd(x))

    ref = actor_forward_ref(x, params)
    assert out.shape == (batch, output_size), out.shape
    err = float(jnp.max(jnp.abs(out - ref)))
    # bf16 MXU operands (weights + normalized activations) loosen the match
    # vs. the f32 reference; tanh output scale keeps it well under 1e-2.
    assert err < 1e-2, f"max abs err {err}"
    print("KERNEL_OK")
</pallas_src>

<mosaic_0001>
module attributes {stable_mosaic.version = 11 : i64} {
  func.func @_fused_actor_kernel(%arg0: memref<64x128xf32, #tpu.memory_space<vmem>>, %arg1: memref<3x128x128xbf16, #tpu.memory_space<vmem>>, %arg2: memref<3x1x128xf32, #tpu.memory_space<vmem>>, %arg3: memref<64x128xf32, #tpu.memory_space<vmem>>, %arg4: memref<64x128xf32, #tpu.memory_space<vmem>>) attributes {dimension_semantics = [], scalar_prefetch = 0 : i64, scratch_operands = 1 : i64, tpu.core_type = #tpu.core_type<tc>} {
    %c0 = arith.constant 0 : index
    %c0_0 = arith.constant 0 : index
    %c0_1 = arith.constant 0 : index
    %0 = vector.load %arg1[%c0, %c0_0, %c0_1] : memref<3x128x128xbf16, #tpu.memory_space<vmem>>, vector<1x128x128xbf16>
    %1 = vector.shape_cast %0 : vector<1x128x128xbf16> to vector<128x128xbf16>
    %c0_2 = arith.constant 0 : index
    %c0_3 = arith.constant 0 : index
    %c0_4 = arith.constant 0 : index
    %2 = vector.load %arg2[%c0_2, %c0_3, %c0_4] : memref<3x1x128xf32, #tpu.memory_space<vmem>>, vector<1x1x128xf32>
    %3 = vector.shape_cast %2 : vector<1x1x128xf32> to vector<1x128xf32>
    %cst = arith.constant 0.000000e+00 : f32
    %4 = vector.broadcast %cst : f32 to vector<1x128xf32>
    %c0_i32 = arith.constant 0 : i32
    %c64_i32 = arith.constant 64 : i32
    %5 = arith.muli %c0_i32, %c64_i32 : i32
    %6 = tpu.assume_multiple %5, 64 : i32
    %7 = arith.index_cast %6 : i32 to index
    %c0_5 = arith.constant 0 : index
    %8 = vector.load %arg0[%7, %c0_5] : memref<64x128xf32, #tpu.memory_space<vmem>>, vector<64x128xf32>
    %cst_6 = arith.constant dense<0.000000e+00> : vector<128xf32>
    %9 = vector.multi_reduction <add>, %8, %cst_6 [0] : vector<64x128xf32> to vector<128xf32>
    %10 = vector.shape_cast %9 : vector<128xf32> to vector<1x128xf32>
    %11 = arith.addf %4, %10 : vector<1x128xf32>
    %c1_i32 = arith.constant 1 : i32
    %cst_7 = arith.constant 1.562500e-02 : f32
    %12 = vector.broadcast %cst_7 : f32 to vector<1x128xf32>
    %13 = arith.mulf %11, %12 : vector<1x128xf32>
    %cst_8 = arith.constant 0.000000e+00 : f32
    %14 = vector.broadcast %cst_8 : f32 to vector<1x128xf32>
    %c0_i32_9 = arith.constant 0 : i32
    %c64_i32_10 = arith.constant 64 : i32
    %15 = arith.muli %c0_i32_9, %c64_i32_10 : i32
    %16 = tpu.assume_multiple %15, 64 : i32
    %17 = arith.index_cast %16 : i32 to index
    %c0_11 = arith.constant 0 : index
    %18 = vector.load %arg0[%17, %c0_11] : memref<64x128xf32, #tpu.memory_space<vmem>>, vector<64x128xf32>
    %19 = vector.broadcast %13 : vector<1x128xf32> to vector<64x128xf32>
    %20 = arith.subf %18, %19 : vector<64x128xf32>
    %21 = arith.mulf %20, %20 : vector<64x128xf32>
    %cst_12 = arith.constant dense<0.000000e+00> : vector<128xf32>
    %22 = vector.multi_reduction <add>, %21, %cst_12 [0] : vector<64x128xf32> to vector<128xf32>
    %23 = vector.shape_cast %22 : vector<128xf32> to vector<1x128xf32>
    %24 = arith.addf %14, %23 : vector<1x128xf32>
    %c1_i32_13 = arith.constant 1 : i32
    %cst_14 = arith.constant 1.562500e-02 : f32
    %25 = vector.broadcast %cst_14 : f32 to vector<1x128xf32>
    %26 = arith.mulf %24, %25 : vector<1x128xf32>
    %cst_15 = arith.constant 0.000000e+00 : f32
    %27 = vector.broadcast %cst_15 : f32 to vector<1x128xf32>
    %28 = arith.maximumf %26, %27 : vector<1x128xf32>
    %cst_16 = arith.constant 9.99999974E-6 : f32
    %29 = vector.broadcast %cst_16 : f32 to vector<1x128xf32>
    %30 = arith.addf %28, %29 : vector<1x128xf32>
    %31 = math.rsqrt %30 : vector<1x128xf32>
    %cst_17 = arith.constant 0.000000e+00 : f32
    %32 = vector.broadcast %cst_17 : f32 to vector<1x128xf32>
    %33 = arith.subf %32, %13 : vector<1x128xf32>
    %34 = arith.mulf %33, %31 : vector<1x128xf32>
    %c0_i32_18 = arith.constant 0 : i32
    %c64_i32_19 = arith.constant 64 : i32
    %35 = arith.muli %c0_i32_18, %c64_i32_19 : i32
    %36 = tpu.assume_multiple %35, 64 : i32
    %37 = arith.index_cast %36 : i32 to index
    %c0_20 = arith.constant 0 : index
    %38 = vector.load %arg0[%37, %c0_20] : memref<64x128xf32, #tpu.memory_space<vmem>>, vector<64x128xf32>
    %39 = vector.broadcast %31 : vector<1x128xf32> to vector<64x128xf32>
    %40 = arith.mulf %38, %39 : vector<64x128xf32>
    %41 = vector.broadcast %34 : vector<1x128xf32> to vector<64x128xf32>
    %42 = arith.addf %40, %41 : vector<64x128xf32>
    %43 = arith.truncf %42 : vector<64x128xf32> to vector<64x128xbf16>
    %cst_21 = arith.constant dense<0.000000e+00> : vector<64x128xf32>
    %44 = tpu.matmul %43, %1, %cst_21 {dimension_numbers = #tpu.dot_dimension_numbers<[1], [0], [0], [1], [0, 0, 1, 1], [], []>} : vector<64x128xbf16>, vector<128x128xbf16>, vector<64x128xf32> -> vector<64x128xf32>
    %45 = vector.broadcast %3 : vector<1x128xf32> to vector<64x128xf32>
    %46 = arith.addf %44, %45 : vector<64x128xf32>
    %cst_22 = arith.constant 0.000000e+00 : f32
    %47 = vector.broadcast %cst_22 : f32 to vector<64x128xf32>
    %48 = arith.maximumf %46, %47 : vector<64x128xf32>
    %49 = arith.index_cast %36 : i32 to index
    %c0_23 = arith.constant 0 : index
    %50 = vector.load %arg4[%49, %c0_23] : memref<64x128xf32, #tpu.memory_space<vmem>>, vector<64x128xf32>
    tpu.vector_store %arg4[%49, %c0_23], %48 {strides = array<i32>} : memref<64x128xf32, #tpu.memory_space<vmem>>, vector<64x128xf32>,
    %c1_i32_24 = arith.constant 1 : i32
    %c1 = arith.constant 1 : index
    %c0_25 = arith.constant 0 : index
    %c0_26 = arith.constant 0 : index
    %51 = vector.load %arg1[%c1, %c0_25, %c0_26] : memref<3x128x128xbf16, #tpu.memory_space<vmem>>, vector<1x128x128xbf16>
    %52 = vector.shape_cast %51 : vector<1x128x128xbf16> to vector<128x128xbf16>
    %c1_27 = arith.constant 1 : index
    %c0_28 = arith.constant 0 : index
    %c0_29 = arith.constant 0 : index
    %53 = vector.load %arg2[%c1_27, %c0_28, %c0_29] : memref<3x1x128xf32, #tpu.memory_space<vmem>>, vector<1x1x128xf32>
    %54 = vector.shape_cast %53 : vector<1x1x128xf32> to vector<1x128xf32>
    %cst_30 = arith.constant 0.000000e+00 : f32
    %55 = vector.broadcast %cst_30 : f32 to vector<1x128xf32>
    %c0_i32_31 = arith.constant 0 : i32
    %c64_i32_32 = arith.constant 64 : i32
    %56 = arith.muli %c0_i32_31, %c64_i32_32 : i32
    %57 = tpu.assume_multiple %56, 64 : i32
    %58 = arith.index_cast %57 : i32 to index
    %c0_33 = arith.constant 0 : index
    %59 = vector.load %arg4[%58, %c0_33] : memref<64x128xf32, #tpu.memory_space<vmem>>, vector<64x128xf32>
    %cst_34 = arith.constant dense<0.000000e+00> : vector<128xf32>
    %60 = vector.multi_reduction <add>, %59, %cst_34 [0] : vector<64x128xf32> to vector<128xf32>
    %61 = vector.shape_cast %60 : vector<128xf32> to vector<1x128xf32>
    %62 = arith.addf %55, %61 : vector<1x128xf32>
    %c1_i32_35 = arith.constant 1 : i32
    %cst_36 = arith.constant 1.562500e-02 : f32
    %63 = vector.broadcast %cst_36 : f32 to vector<1x128xf32>
    %64 = arith.mulf %62, %63 : vector<1x128xf32>
    %cst_37 = arith.constant 0.000000e+00 : f32
    %65 = vector.broadcast %cst_37 : f32 to vector<1x128xf32>
    %c0_i32_38 = arith.constant 0 : i32
    %c64_i32_39 = arith.constant 64 : i32
    %66 = arith.muli %c0_i32_38, %c64_i32_39 : i32
    %67 = tpu.assume_multiple %66, 64 : i32
    %68 = arith.index_cast %67 : i32 to index
    %c0_40 = arith.constant 0 : index
    %69 = vector.load %arg4[%68, %c0_40] : memref<64x128xf32, #tpu.memory_space<vmem>>, vector<64x128xf32>
    %70 = vector.broadcast %64 : vector<1x128xf32> to vector<64x128xf32>
    %71 = arith.subf %69, %70 : vector<64x128xf32>
    %72 = arith.mulf %71, %71 : vector<64x128xf32>
    %cst_41 = arith.constant dense<0.000000e+00> : vector<128xf32>
    %73 = vector.multi_reduction <add>, %72, %cst_41 [0] : vector<64x128xf32> to vector<128xf32>
    %74 = vector.shape_cast %73 : vector<128xf32> to vector<1x128xf32>
    %75 = arith.addf %65, %74 : vector<1x128xf32>
    %c1_i32_42 = arith.constant 1 : i32
    %cst_43 = arith.constant 1.562500e-02 : f32
    %76 = vector.broadcast %cst_43 : f32 to vector<1x128xf32>
    %77 = arith.mulf %75, %76 : vector<1x128xf32>
    %cst_44 = arith.constant 0.000000e+00 : f32
    %78 = vector.broadcast %cst_44 : f32 to vector<1x128xf32>
    %79 = arith.maximumf %77, %78 : vector<1x128xf32>
    %cst_45 = arith.constant 9.99999974E-6 : f32
    %80 = vector.broadcast %cst_45 : f32 to vector<1x128xf32>
    %81 = arith.addf %79, %80 : vector<1x128xf32>
    %82 = math.rsqrt %81 : vector<1x128xf32>
    %cst_46 = arith.constant 0.000000e+00 : f32
    %83 = vector.broadcast %cst_46 : f32 to vector<1x128xf32>
    %84 = arith.subf %83, %64 : vector<1x128xf32>
    %85 = arith.mulf %84, %82 : vector<1x128xf32>
    %c0_i32_47 = arith.constant 0 : i32
    %c64_i32_48 = arith.constant 64 : i32
    %86 = arith.muli %c0_i32_47, %c64_i32_48 : i32
    %87 = tpu.assume_multiple %86, 64 : i32
    %88 = arith.index_cast %87 : i32 to index
    %c0_49 = arith.constant 0 : index
    %89 = vector.load %arg4[%88, %c0_49] : memref<64x128xf32, #tpu.memory_space<vmem>>, vector<64x128xf32>
    %90 = vector.broadcast %82 : vector<1x128xf32> to vector<64x128xf32>
    %91 = arith.mulf %89, %90 : vector<64x128xf32>
    %92 = vector.broadcast %85 : vector<1x128xf32> to vector<64x128xf32>
    %93 = arith.addf %91, %92 : vector<64x128xf32>
    %94 = arith.truncf %93 : vector<64x128xf32> to vector<64x128xbf16>
    %cst_50 = arith.constant dense<0.000000e+00> : vector<64x128xf32>
    %95 = tpu.matmul %94, %52, %cst_50 {dimension_numbers = #tpu.dot_dimension_numbers<[1], [0], [0], [1], [0, 0, 1, 1], [], []>} : vector<64x128xbf16>, vector<128x128xbf16>, vector<64x128xf32> -> vector<64x128xf32>
    %96 = vector.broadcast %54 : vector<1x128xf32> to vector<64x128xf32>
    %97 = arith.addf %95, %96 : vector<64x128xf32>
    %cst_51 = arith.constant 0.000000e+00 : f32
    %98 = vector.broadcast %cst_51 : f32 to vector<64x128xf32>
    %99 = arith.maximumf %97, %98 : vector<64x128xf32>
    %100 = arith.index_cast %87 : i32 to index
    %c0_52 = arith.constant 0 : index
    %101 = vector.load %arg4[%100, %c0_52] : memref<64x128xf32, #tpu.memory_space<vmem>>, vector<64x128xf32>
    tpu.vector_store %arg4[%100, %c0_52], %99 {strides = array<i32>} : memref<64x128xf32, #tpu.memory_space<vmem>>, vector<64x128xf32>,
    %c1_i32_53 = arith.constant 1 : i32
    %c2 = arith.constant 2 : index
    %c0_54 = arith.constant 0 : index
    %c0_55 = arith.constant 0 : index
    %102 = vector.load %arg1[%c2, %c0_54, %c0_55] : memref<3x128x128xbf16, #tpu.memory_space<vmem>>, vector<1x128x128xbf16>
    %103 = vector.shape_cast %102 : vector<1x128x128xbf16> to vector<128x128xbf16>
    %c2_56 = arith.constant 2 : index
    %c0_57 = arith.constant 0 : index
    %c0_58 = arith.constant 0 : index
    %104 = vector.load %arg2[%c2_56, %c0_57, %c0_58] : memref<3x1x128xf32, #tpu.memory_space<vmem>>, vector<1x1x128xf32>
    %105 = vector.shape_cast %104 : vector<1x1x128xf32> to vector<1x128xf32>
    %cst_59 = arith.constant 0.000000e+00 : f32
    %106 = vector.broadcast %cst_59 : f32 to vector<1x128xf32>
    %c0_i32_60 = arith.constant 0 : i32
    %c64_i32_61 = arith.constant 64 : i32
    %107 = arith.muli %c0_i32_60, %c64_i32_61 : i32
    %108 = tpu.assume_multiple %107, 64 : i32
    %109 = arith.index_cast %108 : i32 to index
    %c0_62 = arith.constant 0 : index
    %110 = vector.load %arg4[%109, %c0_62] : memref<64x128xf32, #tpu.memory_space<vmem>>, vector<64x128xf32>
    %cst_63 = arith.constant dense<0.000000e+00> : vector<128xf32>
    %111 = vector.multi_reduction <add>, %110, %cst_63 [0] : vector<64x128xf32> to vector<128xf32>
    %112 = vector.shape_cast %111 : vector<128xf32> to vector<1x128xf32>
    %113 = arith.addf %106, %112 : vector<1x128xf32>
    %c1_i32_64 = arith.constant 1 : i32
    %cst_65 = arith.constant 1.562500e-02 : f32
    %114 = vector.broadcast %cst_65 : f32 to vector<1x128xf32>
    %115 = arith.mulf %113, %114 : vector<1x128xf32>
    %cst_66 = arith.constant 0.000000e+00 : f32
    %116 = vector.broadcast %cst_66 : f32 to vector<1x128xf32>
    %c0_i32_67 = arith.constant 0 : i32
    %c64_i32_68 = arith.constant 64 : i32
    %117 = arith.muli %c0_i32_67, %c64_i32_68 : i32
    %118 = tpu.assume_multiple %117, 64 : i32
    %119 = arith.index_cast %118 : i32 to index
    %c0_69 = arith.constant 0 : index
    %120 = vector.load %arg4[%119, %c0_69] : memref<64x128xf32, #tpu.memory_space<vmem>>, vector<64x128xf32>
    %121 = vector.broadcast %115 : vector<1x128xf32> to vector<64x128xf32>
    %122 = arith.subf %120, %121 : vector<64x128xf32>
    %123 = arith.mulf %122, %122 : vector<64x128xf32>
    %cst_70 = arith.constant dense<0.000000e+00> : vector<128xf32>
    %124 = vector.multi_reduction <add>, %123, %cst_70 [0] : vector<64x128xf32> to vector<128xf32>
    %125 = vector.shape_cast %124 : vector<128xf32> to vector<1x128xf32>
    %126 = arith.addf %116, %125 : vector<1x128xf32>
    %c1_i32_71 = arith.constant 1 : i32
    %cst_72 = arith.constant 1.562500e-02 : f32
    %127 = vector.broadcast %cst_72 : f32 to vector<1x128xf32>
    %128 = arith.mulf %126, %127 : vector<1x128xf32>
    %cst_73 = arith.constant 0.000000e+00 : f32
    %129 = vector.broadcast %cst_73 : f32 to vector<1x128xf32>
    %130 = arith.maximumf %128, %129 : vector<1x128xf32>
    %cst_74 = arith.constant 9.99999974E-6 : f32
    %131 = vector.broadcast %cst_74 : f32 to vector<1x128xf32>
    %132 = arith.addf %130, %131 : vector<1x128xf32>
    %133 = math.rsqrt %132 : vector<1x128xf32>
    %cst_75 = arith.constant 0.000000e+00 : f32
    %134 = vector.broadcast %cst_75 : f32 to vector<1x128xf32>
    %135 = arith.subf %134, %115 : vector<1x128xf32>
    %136 = arith.mulf %135, %133 : vector<1x128xf32>
    %c0_i32_76 = arith.constant 0 : i32
    %c64_i32_77 = arith.constant 64 : i32
    %137 = arith.muli %c0_i32_76, %c64_i32_77 : i32
    %138 = tpu.assume_multiple %137, 64 : i32
    %139 = arith.index_cast %138 : i32 to index
    %c0_78 = arith.constant 0 : index
    %140 = vector.load %arg4[%139, %c0_78] : memref<64x128xf32, #tpu.memory_space<vmem>>, vector<64x128xf32>
    %141 = vector.broadcast %133 : vector<1x128xf32> to vector<64x128xf32>
    %142 = arith.mulf %140, %141 : vector<64x128xf32>
    %143 = vector.broadcast %136 : vector<1x128xf32> to vector<64x128xf32>
    %144 = arith.addf %142, %143 : vector<64x128xf32>
    %145 = arith.truncf %144 : vector<64x128xf32> to vector<64x128xbf16>
    %cst_79 = arith.constant dense<0.000000e+00> : vector<64x128xf32>
    %146 = tpu.matmul %145, %103, %cst_79 {dimension_numbers = #tpu.dot_dimension_numbers<[1], [0], [0], [1], [0, 0, 1, 1], [], []>} : vector<64x128xbf16>, vector<128x128xbf16>, vector<64x128xf32> -> vector<64x128xf32>
    %147 = vector.broadcast %105 : vector<1x128xf32> to vector<64x128xf32>
    %148 = arith.addf %146, %147 : vector<64x128xf32>
    %149 = math.tanh %148 : vector<64x128xf32>
    %150 = arith.index_cast %138 : i32 to index
    %c0_80 = arith.constant 0 : index
    %151 = vector.load %arg3[%150, %c0_80] : memref<64x128xf32, #tpu.memory_space<vmem>>, vector<64x128xf32>
    tpu.vector_store %arg3[%150, %c0_80], %149 {strides = array<i32>} : memref<64x128xf32, #tpu.memory_space<vmem>>, vector<64x128xf32>,
    %c1_i32_81 = arith.constant 1 : i32
    return
  }
}

</mosaic_0001>

<llo_original>
// kernel: fwd.1
$region0: #{fwd.1}
  #allocation0 [shape = 'u32[]', space=smem, size = 0x4, offset = 0x4, fixed_abs, tag = 'smem constant byte address 0x4 - core index']
  #allocation1 [shape = 'u32[144,128]{1,0:T(1,128)}', space=vmem, size = 0x12000, scoped, tag = 'internal scratch']
  #allocation2 [shape = 'f32[64,128]{1,0:T(8,128)}', space=vmem, size = 0x8000, scoped, tag = 'scratch operand']
  %s0 = inlined_call_operand.vmem [shape: f32[64,128], index: 0, kind: input, shape index: {}]
  %s1 = inlined_call_operand.vmem [shape: bf16[3,128,128], index: 1, kind: input, shape index: {}]
  %s2 = inlined_call_operand.vmem [shape: f32[3,1,128], index: 2, kind: input, shape index: {}]
  %s3 = inlined_call_operand.vmem [shape: f32[64,128], index: 3, kind: output, shape index: {}]
  %s4 = sld [smem:[#allocation0]]
  $region22: #{fwd.1} parent=0
    _
  %s6 = ssub.s32 1, %s4
  %s7 = scalar_select 0, %s6, %s4
  // Predicated region
  $region2: #{fwd.1} parent=0 // pred_check
    _
  $region3: #{fwd.1} parent=0 // pred_check_branch
    %9 = sbr.rel (0) target = $region5
  $region4: #{fwd.1} parent=0 // pred_region
    _
  $region5: #{fwd.1} parent=0 // pred_fallthru
    _
  // Predicated region
  $region6: #{fwd.1} parent=0 // pred_check
    _
  $region7: #{fwd.1} parent=0 // pred_check_branch
    %11 = sbr.rel (0) target = $region9
  $region8: #{fwd.1} parent=0 // pred_region
    _
  $region9: #{fwd.1} parent=0 // pred_fallthru
    _
  // Predicated region
  $region10: #{fwd.1} parent=0 // pred_check
    _
  $region11: #{fwd.1} parent=0 // pred_check_branch
    %13 = sbr.rel (0) target = $region13
  $region12: #{fwd.1} parent=0 // pred_region
    _
  $region13: #{fwd.1} parent=0 // pred_fallthru
    _
  %v15 = vld [vmem:[%s1] sm:$0xf]
  %v16 = vld [vmem:[%s1 + $0x4] sm:$0xf]
  %v17 = vld [vmem:[%s1 + $0x8] sm:$0xf]
  %v18 = vld [vmem:[%s1 + $0xc] sm:$0xf]
  %v19 = vld [vmem:[%s1 + $0x10] sm:$0xf]
  %v20 = vld [vmem:[%s1 + $0x14] sm:$0xf]
  %v21 = vld [vmem:[%s1 + $0x18] sm:$0xf]
  %v22 = vld [vmem:[%s1 + $0x1c] sm:$0xf]
  %v23 = vld [vmem:[%s1 + $0x20] sm:$0xf]
  %v24 = vld [vmem:[%s1 + $0x24] sm:$0xf]
  %v25 = vld [vmem:[%s1 + $0x28] sm:$0xf]
  %v26 = vld [vmem:[%s1 + $0x2c] sm:$0xf]
  %v27 = vld [vmem:[%s1 + $0x30] sm:$0xf]
  %v28 = vld [vmem:[%s1 + $0x34] sm:$0xf]
  %v29 = vld [vmem:[%s1 + $0x38] sm:$0xf]
  %v30 = vld [vmem:[%s1 + $0x3c] sm:$0xf]
  %v31 = vld [vmem:[%s2] sm:$0x1]
  %v32 = vld [vmem:[%s0] sm:$0xff]
  %v33 = vld [vmem:[%s0 + $0x8] sm:$0xff]
  %v34 = vld [vmem:[%s0 + $0x10] sm:$0xff]
  %v35 = vld [vmem:[%s0 + $0x18] sm:$0xff]
  %v36 = vld [vmem:[%s0 + $0x20] sm:$0xff]
  %v37 = vld [vmem:[%s0 + $0x28] sm:$0xff]
  %v38 = vld [vmem:[%s0 + $0x30] sm:$0xff]
  %v39 = vld [vmem:[%s0 + $0x38] sm:$0xff]
  %v40 = vadd.f32 %v32, %v33
  %v41 = vadd.f32 %v40, %v34
  %v42 = vadd.f32 %v41, %v35
  %v43 = vadd.f32 %v42, %v36
  %v44 = vadd.f32 %v43, %v37
  %v45 = vadd.f32 %v44, %v38
  %v46 = vadd.f32 %v45, %v39
  %v47 = vrot.slane %v46, 4
  %v48 = vadd.f32 %v46, %v47
  %v49 = vrot.slane %v48, 2
  %v50 = vadd.f32 %v48, %v49
  %v51 = vrot.slane %v50, 1
  %v52 = vadd.f32 %v50, %v51
  %v53 = vadd.f32 %v52, 0.0
  %v54 = vmul.f32 %v53, 0.015625
  %v55 = vsub.f32 %v32, %v54
  %v56 = vsub.f32 %v33, %v54
  %v57 = vsub.f32 %v34, %v54
  %v58 = vsub.f32 %v35, %v54
  %v59 = vsub.f32 %v36, %v54
  %v60 = vsub.f32 %v37, %v54
  %v61 = vsub.f32 %v38, %v54
  %v62 = vsub.f32 %v39, %v54
  %v63 = vmul.f32 %v55, %v55
  %v64 = vmul.f32 %v56, %v56
  %v65 = vmul.f32 %v57, %v57
  %v66 = vmul.f32 %v58, %v58
  %v67 = vmul.f32 %v59, %v59
  %v68 = vmul.f32 %v60, %v60
  %v69 = vmul.f32 %v61, %v61
  %v70 = vmul.f32 %v62, %v62
  %v71 = vadd.f32 %v63, %v64
  %v72 = vadd.f32 %v71, %v65
  %v73 = vadd.f32 %v72, %v66
  %v74 = vadd.f32 %v73, %v67
  %v75 = vadd.f32 %v74, %v68
  %v76 = vadd.f32 %v75, %v69
  %v77 = vadd.f32 %v76, %v70
  %v78 = vrot.slane %v77, 4
  %v79 = vadd.f32 %v77, %v78
  %v80 = vrot.slane %v79, 2
  %v81 = vadd.f32 %v79, %v80
  %v82 = vrot.slane %v81, 1
  %v83 = vadd.f32 %v81, %v82
  %v84 = vadd.f32 %v83, 0.0
  %v85 = vmul.f32 %v84, 0.015625
  %v86 = vmax.f32 %v85, 0.0
  %v87 = vadd.f32 %v86, 1e-05
  %v88 = vrsqrt.pop %v87
  %v89 = vsub.f32 0.0, %v54
  %v90 = vmul.f32 %v89, %v88
  %v91 = vmul.f32 %v32, %v88
  %v92 = vmul.f32 %v33, %v88
  %v93 = vmul.f32 %v34, %v88
  %v94 = vmul.f32 %v35, %v88
  %v95 = vmul.f32 %v36, %v88
  %v96 = vmul.f32 %v37, %v88
  %v97 = vmul.f32 %v38, %v88
  %v98 = vmul.f32 %v39, %v88
  %v99 = vadd.f32 %v91, %v90
  %v100 = vadd.f32 %v92, %v90
  %v101 = vadd.f32 %v93, %v90
  %v102 = vadd.f32 %v94, %v90
  %v103 = vadd.f32 %v95, %v90
  %v104 = vadd.f32 %v96, %v90
  %v105 = vadd.f32 %v97, %v90
  %v106 = vadd.f32 %v98, %v90
  %v107 = vpack.c.bf16 %v100, %v99
  %v108 = vpack.c.bf16 %v102, %v101
  %v109 = vpack.c.bf16 %v104, %v103
  %v110 = vpack.c.bf16 %v106, %v105
  %v112 = vlaneseq
  %v113 = vshrl.u32 %v112, 7
  %v114 = vsub.s32 0, %v113
  %v115 = vrot.slane %v31, %v114
  %v133 = vunpack.c.l.b16 %v15
  %v134 = vunpack.c.l.b16 %v16
  %v135 = vunpack.c.l.b16 %v17
  %v136 = vunpack.c.l.b16 %v18
  %v137 = vunpack.c.l.b16 %v19
  %v138 = vunpack.c.l.b16 %v20
  %v139 = vunpack.c.l.b16 %v21
  %v140 = vunpack.c.l.b16 %v22
  %v141 = vunpack.c.l.b16 %v23
  %v142 = vunpack.c.l.b16 %v24
  %v143 = vunpack.c.l.b16 %v25
  %v144 = vunpack.c.l.b16 %v26
  %v145 = vunpack.c.l.b16 %v27
  %v146 = vunpack.c.l.b16 %v28
  %v147 = vunpack.c.l.b16 %v29
  %v148 = vunpack.c.l.b16 %v30
  %v149 = vpack.c.b16 %v134, %v133
  %v150 = vpack.c.b16 %v136, %v135
  %v151 = vpack.c.b16 %v138, %v137
  %v152 = vpack.c.b16 %v140, %v139
  %v153 = vpack.c.b16 %v142, %v141
  %v154 = vpack.c.b16 %v144, %v143
  %v155 = vpack.c.b16 %v146, %v145
  %v156 = vpack.c.b16 %v148, %v147
  %165 = vmatprep.subr.bf16.mxu0 0
  %166 = vmatpush1.bf16.msra.mxu0 %v149
  %167 = vmatprep.subr.bf16.mxu0 0
  %168 = vmatpush1.bf16.msra.mxu0 %v150
  %169 = vmatprep.subr.bf16.mxu0 0
  %170 = vmatpush1.bf16.msra.mxu0 %v151
  %171 = vmatprep.subr.bf16.mxu0 0
  %172 = vmatpush1.bf16.msra.mxu0 %v152
  %173 = vmatprep.subr.bf16.mxu0 0
  %174 = vmatpush1.bf16.msra.mxu0 %v153
  %175 = vmatprep.subr.bf16.mxu0 0
  %176 = vmatpush1.bf16.msra.mxu0 %v154
  %177 = vmatprep.subr.bf16.mxu0 0
  %178 = vmatpush1.bf16.msra.mxu0 %v155
  %179 = vmatprep.subr.bf16.mxu0 0
  %180 = vmatpush1.bf16.msra.mxu0 %v156
  %181 = vmatprep.subr.bf16.mxu0 0
  %182 = vmatpush1.bf16.msra.mxu0 0
  %183 = vmatprep.subr.bf16.mxu0 0
  %184 = vmatpush1.bf16.msra.mxu0 0
  %185 = vmatprep.subr.bf16.mxu0 0
  %186 = vmatpush1.bf16.msra.mxu0 0
  %187 = vmatprep.subr.bf16.mxu0 0
  %188 = vmatpush1.bf16.msra.mxu0 0
  %189 = vmatprep.subr.bf16.mxu0 0
  %190 = vmatpush1.bf16.msra.mxu0 0
  %191 = vmatprep.subr.bf16.mxu0 0
  %192 = vmatpush1.bf16.msra.mxu0 0
  %193 = vmatprep.subr.bf16.mxu0 0
  %194 = vmatpush1.bf16.msra.mxu0 0
  %195 = vmatprep.subr.bf16.mxu0 0
  %196 = vmatpush1.bf16.msra.mxu0 0
  %197 = vmatprep.mubr.bf16.mxu0 0
  %198 = vmatmul.mubr.bf16.gmra.mrb[0].mxu0 %v107
  %v199 = vpop.f32.mrb[0].mxu0
  %v200 = vadd.f32 %v115, %v199
  %v201 = vpop.f32.mrb[0].mxu0
  %v202 = vpop.f32.mrb[0].mxu0
  %v203 = vadd.f32 %v115, %v202
  %v204 = vpop.f32.mrb[0].mxu0
  %205 = vmatprep.mubr.bf16.mxu0 0
  %206 = vmatmul.mubr.bf16.gmra.mrb[0].mxu0 %v108
  %v207 = vpop.f32.mrb[0].mxu0
  %v208 = vadd.f32 %v115, %v207
  %v209 = vpop.f32.mrb[0].mxu0
  %v210 = vpop.f32.mrb[0].mxu0
  %v211 = vadd.f32 %v115, %v210
  %v212 = vpop.f32.mrb[0].mxu0
  %213 = vmatprep.mubr.bf16.mxu0 0
  %214 = vmatmul.mubr.bf16.gmra.mrb[0].mxu0 %v109
  %v215 = vpop.f32.mrb[0].mxu0
  %v216 = vadd.f32 %v115, %v215
  %v217 = vpop.f32.mrb[0].mxu0
  %v218 = vpop.f32.mrb[0].mxu0
  %v219 = vadd.f32 %v115, %v218
  %v220 = vpop.f32.mrb[0].mxu0
  %221 = vmatprep.mubr.bf16.mxu0 0
  %222 = vmatmul.mubr.bf16.gmra.mrb[0].mxu0 %v110
  %v223 = vpop.f32.mrb[0].mxu0
  %v224 = vadd.f32 %v115, %v223
  %v225 = vpop.f32.mrb[0].mxu0
  %v226 = vpop.f32.mrb[0].mxu0
  %v227 = vadd.f32 %v115, %v226
  %v228 = vpop.f32.mrb[0].mxu0
  %229 = vdwg.mxu0
  %v230 = vmax.f32 %v200, 0.0
  %v231 = vmax.f32 %v203, 0.0
  %v232 = vmax.f32 %v208, 0.0
  %v233 = vmax.f32 %v211, 0.0
  %v234 = vmax.f32 %v216, 0.0
  %v235 = vmax.f32 %v219, 0.0
  %v236 = vmax.f32 %v224, 0.0
  %v237 = vmax.f32 %v227, 0.0
  %238 = vst [vmem:[#allocation2] sm:$0xff] %v230
  %239 = vst [vmem:[#allocation2 + $0x8] sm:$0xff] %v231
  %240 = vst [vmem:[#allocation2 + $0x10] sm:$0xff] %v232
  %241 = vst [vmem:[#allocation2 + $0x18] sm:$0xff] %v233
  %242 = vst [vmem:[#allocation2 + $0x20] sm:$0xff] %v234
  %243 = vst [vmem:[#allocation2 + $0x28] sm:$0xff] %v235
  %244 = vst [vmem:[#allocation2 + $0x30] sm:$0xff] %v236
  %245 = vst [vmem:[#allocation2 + $0x38] sm:$0xff] %v237
  %s246 = scalar_lea.vmem %s1, 64
  %v247 = vld [vmem:[%s246] sm:$0xf]
  %v248 = vld [vmem:[%s246 + $0x4] sm:$0xf]
  %v249 = vld [vmem:[%s246 + $0x8] sm:$0xf]
  %v250 = vld [vmem:[%s246 + $0xc] sm:$0xf]
  %v251 = vld [vmem:[%s246 + $0x10] sm:$0xf]
  %v252 = vld [vmem:[%s246 + $0x14] sm:$0xf]
  %v253 = vld [vmem:[%s246 + $0x18] sm:$0xf]
  %v254 = vld [vmem:[%s246 + $0x1c] sm:$0xf]
  %v255 = vld [vmem:[%s246 + $0x20] sm:$0xf]
  %v256 = vld [vmem:[%s246 + $0x24] sm:$0xf]
  %v257 = vld [vmem:[%s246 + $0x28] sm:$0xf]
  %v258 = vld [vmem:[%s246 + $0x2c] sm:$0xf]
  %v259 = vld [vmem:[%s246 + $0x30] sm:$0xf]
  %v260 = vld [vmem:[%s246 + $0x34] sm:$0xf]
  %v261 = vld [vmem:[%s246 + $0x38] sm:$0xf]
  %v262 = vld [vmem:[%s246 + $0x3c] sm:$0xf]
  %s263 = scalar_lea.vmem %s2, 1
  %v264 = vld [vmem:[%s263] sm:$0x1]
  %v265 = vld [vmem:[#allocation2] sm:$0xff]
  %v266 = vld [vmem:[#allocation2 + $0x8] sm:$0xff]
  %v267 = vld [vmem:[#allocation2 + $0x10] sm:$0xff]
  %v268 = vld [vmem:[#allocation2 + $0x18] sm:$0xff]
  %v269 = vld [vmem:[#allocation2 + $0x20] sm:$0xff]
  %v270 = vld [vmem:[#allocation2 + $0x28] sm:$0xff]
  %v271 = vld [vmem:[#allocation2 + $0x30] sm:$0xff]
  %v272 = vld [vmem:[#allocation2 + $0x38] sm:$0xff]
  %v273 = vadd.f32 %v265, %v266
  %v274 = vadd.f32 %v273, %v267
  %v275 = vadd.f32 %v274, %v268
  %v276 = vadd.f32 %v275, %v269
  %v277 = vadd.f32 %v276, %v270
  %v278 = vadd.f32 %v277, %v271
  %v279 = vadd.f32 %v278, %v272
  %v280 = vrot.slane %v279, 4
  %v281 = vadd.f32 %v279, %v280
  %v282 = vrot.slane %v281, 2
  %v283 = vadd.f32 %v281, %v282
  %v284 = vrot.slane %v283, 1
  %v285 = vadd.f32 %v283, %v284
  %v286 = vadd.f32 %v285, 0.0
  %v287 = vmul.f32 %v286, 0.015625
  %v288 = vsub.f32 %v265, %v287
  %v289 = vsub.f32 %v266, %v287
  %v290 = vsub.f32 %v267, %v287
  %v291 = vsub.f32 %v268, %v287
  %v292 = vsub.f32 %v269, %v287
  %v293 = vsub.f32 %v270, %v287
  %v294 = vsub.f32 %v271, %v287
  %v295 = vsub.f32 %v272, %v287
  %v296 = vmul.f32 %v288, %v288
  %v297 = vmul.f32 %v289, %v289
  %v298 = vmul.f32 %v290, %v290
  %v299 = vmul.f32 %v291, %v291
  %v300 = vmul.f32 %v292, %v292
  %v301 = vmul.f32 %v293, %v293
  %v302 = vmul.f32 %v294, %v294
  %v303 = vmul.f32 %v295, %v295
  %v304 = vadd.f32 %v296, %v297
  %v305 = vadd.f32 %v304, %v298
  %v306 = vadd.f32 %v305, %v299
  %v307 = vadd.f32 %v306, %v300
  %v308 = vadd.f32 %v307, %v301
  %v309 = vadd.f32 %v308, %v302
  %v310 = vadd.f32 %v309, %v303
  %v311 = vrot.slane %v310, 4
  %v312 = vadd.f32 %v310, %v311
  %v313 = vrot.slane %v312, 2
  %v314 = vadd.f32 %v312, %v313
  %v315 = vrot.slane %v314, 1
  %v316 = vadd.f32 %v314, %v315
  %v317 = vadd.f32 %v316, 0.0
  %v318 = vmul.f32 %v317, 0.015625
  %v319 = vmax.f32 %v318, 0.0
  %v320 = vadd.f32 %v319, 1e-05
  %v321 = vrsqrt.pop %v320
  %v322 = vsub.f32 0.0, %v287
  %v323 = vmul.f32 %v322, %v321
  %v324 = vmul.f32 %v265, %v321
  %v325 = vmul.f32 %v266, %v321
  %v326 = vmul.f32 %v267, %v321
  %v327 = vmul.f32 %v268, %v321
  %v328 = vmul.f32 %v269, %v321
  %v329 = vmul.f32 %v270, %v321
  %v330 = vmul.f32 %v271, %v321
  %v331 = vmul.f32 %v272, %v321
  %v332 = vadd.f32 %v324, %v323
  %v333 = vadd.f32 %v325, %v323
  %v334 = vadd.f32 %v326, %v323
  %v335 = vadd.f32 %v327, %v323
  %v336 = vadd.f32 %v328, %v323
  %v337 = vadd.f32 %v329, %v323
  %v338 = vadd.f32 %v330, %v323
  %v339 = vadd.f32 %v331, %v323
  %v340 = vpack.c.bf16 %v333, %v332
  %v341 = vpack.c.bf16 %v335, %v334
  %v342 = vpack.c.bf16 %v337, %v336
  %v343 = vpack.c.bf16 %v339, %v338
  %v345 = vlaneseq
  %v346 = vshrl.u32 %v345, 7
  %v347 = vsub.s32 0, %v346
  %v348 = vrot.slane %v264, %v347
  %v366 = vunpack.c.l.b16 %v247
  %v367 = vunpack.c.l.b16 %v248
  %v368 = vunpack.c.l.b16 %v249
  %v369 = vunpack.c.l.b16 %v250
  %v370 = vunpack.c.l.b16 %v251
  %v371 = vunpack.c.l.b16 %v252
  %v372 = vunpack.c.l.b16 %v253
  %v373 = vunpack.c.l.b16 %v254
  %v374 = vunpack.c.l.b16 %v255
  %v375 = vunpack.c.l.b16 %v256
  %v376 = vunpack.c.l.b16 %v257
  %v377 = vunpack.c.l.b16 %v258
  %v378 = vunpack.c.l.b16 %v259
  %v379 = vunpack.c.l.b16 %v260
  %v380 = vunpack.c.l.b16 %v261
  %v381 = vunpack.c.l.b16 %v262
  %v382 = vpack.c.b16 %v367, %v366
  %v383 = vpack.c.b16 %v369, %v368
  %v384 = vpack.c.b16 %v371, %v370
  %v385 = vpack.c.b16 %v373, %v372
  %v386 = vpack.c.b16 %v375, %v374
  %v387 = vpack.c.b16 %v377, %v376
  %v388 = vpack.c.b16 %v379, %v378
  %v389 = vpack.c.b16 %v381, %v380
  %398 = vmatprep.subr.bf16.mxu0 0
  %399 = vmatpush1.bf16.msra.mxu0 %v382
  %400 = vmatprep.subr.bf16.mxu0 0
  %401 = vmatpush1.bf16.msra.mxu0 %v383
  %402 = vmatprep.subr.bf16.mxu0 0
  %403 = vmatpush1.bf16.msra.mxu0 %v384
  %404 = vmatprep.subr.bf16.mxu0 0
  %405 = vmatpush1.bf16.msra.mxu0 %v385
  %406 = vmatprep.subr.bf16.mxu0 0
  %407 = vmatpush1.bf16.msra.mxu0 %v386
  %408 = vmatprep.subr.bf16.mxu0 0
  %409 = vmatpush1.bf16.msra.mxu0 %v387
  %410 = vmatprep.subr.bf16.mxu0 0
  %411 = vmatpush1.bf16.msra.mxu0 %v388
  %412 = vmatprep.subr.bf16.mxu0 0
  %413 = vmatpush1.bf16.msra.mxu0 %v389
  %414 = vmatprep.subr.bf16.mxu0 0
  %415 = vmatpush1.bf16.msra.mxu0 0
  %416 = vmatprep.subr.bf16.mxu0 0
  %417 = vmatpush1.bf16.msra.mxu0 0
  %418 = vmatprep.subr.bf16.mxu0 0
  %419 = vmatpush1.bf16.msra.mxu0 0
  %420 = vmatprep.subr.bf16.mxu0 0
  %421 = vmatpush1.bf16.msra.mxu0 0
  %422 = vmatprep.subr.bf16.mxu0 0
  %423 = vmatpush1.bf16.msra.mxu0 0
  %424 = vmatprep.subr.bf16.mxu0 0
  %425 = vmatpush1.bf16.msra.mxu0 0
  %426 = vmatprep.subr.bf16.mxu0 0
  %427 = vmatpush1.bf16.msra.mxu0 0
  %428 = vmatprep.subr.bf16.mxu0 0
  %429 = vmatpush1.bf16.msra.mxu0 0
  %430 = vmatprep.mubr.bf16.mxu0 0
  %431 = vmatmul.mubr.bf16.gmra.mrb[0].mxu0 %v340
  %v432 = vpop.f32.mrb[0].mxu0
  %v433 = vadd.f32 %v348, %v432
  %v434 = vpop.f32.mrb[0].mxu0
  %v435 = vpop.f32.mrb[0].mxu0
  %v436 = vadd.f32 %v348, %v435
  %v437 = vpop.f32.mrb[0].mxu0
  %438 = vmatprep.mubr.bf16.mxu0 0
  %439 = vmatmul.mubr.bf16.gmra.mrb[0].mxu0 %v341
  %v440 = vpop.f32.mrb[0].mxu0
  %v441 = vadd.f32 %v348, %v440
  %v442 = vpop.f32.mrb[0].mxu0
  %v443 = vpop.f32.mrb[0].mxu0
  %v444 = vadd.f32 %v348, %v443
  %v445 = vpop.f32.mrb[0].mxu0
  %446 = vmatprep.mubr.bf16.mxu0 0
  %447 = vmatmul.mubr.bf16.gmra.mrb[0].mxu0 %v342
  %v448 = vpop.f32.mrb[0].mxu0
  %v449 = vadd.f32 %v348, %v448
  %v450 = vpop.f32.mrb[0].mxu0
  %v451 = vpop.f32.mrb[0].mxu0
  %v452 = vadd.f32 %v348, %v451
  %v453 = vpop.f32.mrb[0].mxu0
  %454 = vmatprep.mubr.bf16.mxu0 0
  %455 = vmatmul.mubr.bf16.gmra.mrb[0].mxu0 %v343
  %v456 = vpop.f32.mrb[0].mxu0
  %v457 = vadd.f32 %v348, %v456
  %v458 = vpop.f32.mrb[0].mxu0
  %v459 = vpop.f32.mrb[0].mxu0
  %v460 = vadd.f32 %v348, %v459
  %v461 = vpop.f32.mrb[0].mxu0
  %462 = vdwg.mxu0
  %v463 = vmax.f32 %v433, 0.0
  %v464 = vmax.f32 %v436, 0.0
  %v465 = vmax.f32 %v441, 0.0
  %v466 = vmax.f32 %v444, 0.0
  %v467 = vmax.f32 %v449, 0.0
  %v468 = vmax.f32 %v452, 0.0
  %v469 = vmax.f32 %v457, 0.0
  %v470 = vmax.f32 %v460, 0.0
  %471 = vst [vmem:[#allocation2] sm:$0xff] %v463
  %472 = vst [vmem:[#allocation2 + $0x8] sm:$0xff] %v464
  %473 = vst [vmem:[#allocation2 + $0x10] sm:$0xff] %v465
  %474 = vst [vmem:[#allocation2 + $0x18] sm:$0xff] %v466
  %475 = vst [vmem:[#allocation2 + $0x20] sm:$0xff] %v467
  %476 = vst [vmem:[#allocation2 + $0x28] sm:$0xff] %v468
  %477 = vst [vmem:[#allocation2 + $0x30] sm:$0xff] %v469
  %478 = vst [vmem:[#allocation2 + $0x38] sm:$0xff] %v470
  %s479 = scalar_lea.vmem %s1, 128
  %v480 = vld [vmem:[%s479] sm:$0xf]
  %v481 = vld [vmem:[%s479 + $0x4] sm:$0xf]
  %v482 = vld [vmem:[%s479 + $0x8] sm:$0xf]
  %v483 = vld [vmem:[%s479 + $0xc] sm:$0xf]
  %v484 = vld [vmem:[%s479 + $0x10] sm:$0xf]
  %v485 = vld [vmem:[%s479 + $0x14] sm:$0xf]
  %v486 = vld [vmem:[%s479 + $0x18] sm:$0xf]
  %v487 = vld [vmem:[%s479 + $0x1c] sm:$0xf]
  %v488 = vld [vmem:[%s479 + $0x20] sm:$0xf]
  %v489 = vld [vmem:[%s479 + $0x24] sm:$0xf]
  %v490 = vld [vmem:[%s479 + $0x28] sm:$0xf]
  %v491 = vld [vmem:[%s479 + $0x2c] sm:$0xf]
  %v492 = vld [vmem:[%s479 + $0x30] sm:$0xf]
  %v493 = vld [vmem:[%s479 + $0x34] sm:$0xf]
  %v494 = vld [vmem:[%s479 + $0x38] sm:$0xf]
  %v495 = vld [vmem:[%s479 + $0x3c] sm:$0xf]
  %s496 = scalar_lea.vmem %s2, 2
  %v497 = vld [vmem:[%s496] sm:$0x1]
  %v498 = vld [vmem:[#allocation2] sm:$0xff]
  %v499 = vld [vmem:[#allocation2 + $0x8] sm:$0xff]
  %v500 = vld [vmem:[#allocation2 + $0x10] sm:$0xff]
  %v501 = vld [vmem:[#allocation2 + $0x18] sm:$0xff]
  %v502 = vld [vmem:[#allocation2 + $0x20] sm:$0xff]
  %v503 = vld [vmem:[#allocation2 + $0x28] sm:$0xff]
  %v504 = vld [vmem:[#allocation2 + $0x30] sm:$0xff]
  %v505 = vld [vmem:[#allocation2 + $0x38] sm:$0xff]
  %v506 = vadd.f32 %v498, %v499
  %v507 = vadd.f32 %v506, %v500
  %v508 = vadd.f32 %v507, %v501
  %v509 = vadd.f32 %v508, %v502
  %v510 = vadd.f32 %v509, %v503
  %v511 = vadd.f32 %v510, %v504
  %v512 = vadd.f32 %v511, %v505
  %v513 = vrot.slane %v512, 4
  %v514 = vadd.f32 %v512, %v513
  %v515 = vrot.slane %v514, 2
  %v516 = vadd.f32 %v514, %v515
  %v517 = vrot.slane %v516, 1
  %v518 = vadd.f32 %v516, %v517
  %v519 = vadd.f32 %v518, 0.0
  %v520 = vmul.f32 %v519, 0.015625
  %v521 = vsub.f32 %v498, %v520
  %v522 = vsub.f32 %v499, %v520
  %v523 = vsub.f32 %v500, %v520
  %v524 = vsub.f32 %v501, %v520
  %v525 = vsub.f32 %v502, %v520
  %v526 = vsub.f32 %v503, %v520
  %v527 = vsub.f32 %v504, %v520
  %v528 = vsub.f32 %v505, %v520
  %v529 = vmul.f32 %v521, %v521
  %v530 = vmul.f32 %v522, %v522
  %v531 = vmul.f32 %v523, %v523
  %v532 = vmul.f32 %v524, %v524
  %v533 = vmul.f32 %v525, %v525
  %v534 = vmul.f32 %v526, %v526
  %v535 = vmul.f32 %v527, %v527
  %v536 = vmul.f32 %v528, %v528
  %v537 = vadd.f32 %v529, %v530
  %v538 = vadd.f32 %v537, %v531
  %v539 = vadd.f32 %v538, %v532
  %v540 = vadd.f32 %v539, %v533
  %v541 = vadd.f32 %v540, %v534
  %v542 = vadd.f32 %v541, %v535
  %v543 = vadd.f32 %v542, %v536
  %v544 = vrot.slane %v543, 4
  %v545 = vadd.f32 %v543, %v544
  %v546 = vrot.slane %v545, 2
  %v547 = vadd.f32 %v545, %v546
  %v548 = vrot.slane %v547, 1
  %v549 = vadd.f32 %v547, %v548
  %v550 = vadd.f32 %v549, 0.0
  %v551 = vmul.f32 %v550, 0.015625
  %v552 = vmax.f32 %v551, 0.0
  %v553 = vadd.f32 %v552, 1e-05
  %v554 = vrsqrt.pop %v553
  %v555 = vsub.f32 0.0, %v520
  %v556 = vmul.f32 %v555, %v554
  %v557 = vmul.f32 %v498, %v554
  %v558 = vmul.f32 %v499, %v554
  %v559 = vmul.f32 %v500, %v554
  %v560 = vmul.f32 %v501, %v554
  %v561 = vmul.f32 %v502, %v554
  %v562 = vmul.f32 %v503, %v554
  %v563 = vmul.f32 %v504, %v554
  %v564 = vmul.f32 %v505, %v554
  %v565 = vadd.f32 %v557, %v556
  %v566 = vadd.f32 %v558, %v556
  %v567 = vadd.f32 %v559, %v556
  %v568 = vadd.f32 %v560, %v556
  %v569 = vadd.f32 %v561, %v556
  %v570 = vadd.f32 %v562, %v556
  %v571 = vadd.f32 %v563, %v556
  %v572 = vadd.f32 %v564, %v556
  %v573 = vpack.c.bf16 %v566, %v565
  %v574 = vpack.c.bf16 %v568, %v567
  %v575 = vpack.c.bf16 %v570, %v569
  %v576 = vpack.c.bf16 %v572, %v571
  %v578 = vlaneseq
  %v579 = vshrl.u32 %v578, 7
  %v580 = vsub.s32 0, %v579
  %v581 = vrot.slane %v497, %v580
  %v599 = vunpack.c.l.b16 %v480
  %v600 = vunpack.c.l.b16 %v481
  %v601 = vunpack.c.l.b16 %v482
  %v602 = vunpack.c.l.b16 %v483
  %v603 = vunpack.c.l.b16 %v484
  %v604 = vunpack.c.l.b16 %v485
  %v605 = vunpack.c.l.b16 %v486
  %v606 = vunpack.c.l.b16 %v487
  %v607 = vunpack.c.l.b16 %v488
  %v608 = vunpack.c.l.b16 %v489
  %v609 = vunpack.c.l.b16 %v490
  %v610 = vunpack.c.l.b16 %v491
  %v611 = vunpack.c.l.b16 %v492
  %v612 = vunpack.c.l.b16 %v493
  %v613 = vunpack.c.l.b16 %v494
  %v614 = vunpack.c.l.b16 %v495
  %v615 = vpack.c.b16 %v600, %v599
  %v616 = vpack.c.b16 %v602, %v601
  %v617 = vpack.c.b16 %v604, %v603
  %v618 = vpack.c.b16 %v606, %v605
  %v619 = vpack.c.b16 %v608, %v607
  %v620 = vpack.c.b16 %v610, %v609
  %v621 = vpack.c.b16 %v612, %v611
  %v622 = vpack.c.b16 %v614, %v613
  %631 = vmatprep.subr.bf16.mxu0 0
  %632 = vmatpush1.bf16.msra.mxu0 %v615
  %633 = vmatprep.subr.bf16.mxu0 0
  %634 = vmatpush1.bf16.msra.mxu0 %v616
  %635 = vmatprep.subr.bf16.mxu0 0
  %636 = vmatpush1.bf16.msra.mxu0 %v617
  %637 = vmatprep.subr.bf16.mxu0 0
  %638 = vmatpush1.bf16.msra.mxu0 %v618
  %639 = vmatprep.subr.bf16.mxu0 0
  %640 = vmatpush1.bf16.msra.mxu0 %v619
  %641 = vmatprep.subr.bf16.mxu0 0
  %642 = vmatpush1.bf16.msra.mxu0 %v620
  %643 = vmatprep.subr.bf16.mxu0 0
  %644 = vmatpush1.bf16.msra.mxu0 %v621
  %645 = vmatprep.subr.bf16.mxu0 0
  %646 = vmatpush1.bf16.msra.mxu0 %v622
  %647 = vmatprep.subr.bf16.mxu0 0
  %648 = vmatpush1.bf16.msra.mxu0 0
  %649 = vmatprep.subr.bf16.mxu0 0
  %650 = vmatpush1.bf16.msra.mxu0 0
  %651 = vmatprep.subr.bf16.mxu0 0
  %652 = vmatpush1.bf16.msra.mxu0 0
  %653 = vmatprep.subr.bf16.mxu0 0
  %654 = vmatpush1.bf16.msra.mxu0 0
  %655 = vmatprep.subr.bf16.mxu0 0
  %656 = vmatpush1.bf16.msra.mxu0 0
  %657 = vmatprep.subr.bf16.mxu0 0
  %658 = vmatpush1.bf16.msra.mxu0 0
  %659 = vmatprep.subr.bf16.mxu0 0
  %660 = vmatpush1.bf16.msra.mxu0 0
  %661 = vmatprep.subr.bf16.mxu0 0
  %662 = vmatpush1.bf16.msra.mxu0 0
  %663 = vmatprep.mubr.bf16.mxu0 0
  %664 = vmatmul.mubr.bf16.gmra.mrb[0].mxu0 %v573
  %v665 = vpop.f32.mrb[0].mxu0
  %v666 = vadd.f32 %v581, %v665
  %v667 = vpop.f32.mrb[0].mxu0
  %v668 = vpop.f32.mrb[0].mxu0
  %v669 = vadd.f32 %v581, %v668
  %v670 = vpop.f32.mrb[0].mxu0
  %671 = vmatprep.mubr.bf16.mxu0 0
  %672 = vmatmul.mubr.bf16.gmra.mrb[0].mxu0 %v574
  %v673 = vpop.f32.mrb[0].mxu0
  %v674 = vadd.f32 %v581, %v673
  %v675 = vpop.f32.mrb[0].mxu0
  %v676 = vpop.f32.mrb[0].mxu0
  %v677 = vadd.f32 %v581, %v676
  %v678 = vpop.f32.mrb[0].mxu0
  %679 = vmatprep.mubr.bf16.mxu0 0
  %680 = vmatmul.mubr.bf16.gmra.mrb[0].mxu0 %v575
  %v681 = vpop.f32.mrb[0].mxu0
  %v682 = vadd.f32 %v581, %v681
  %v683 = vpop.f32.mrb[0].mxu0
  %v684 = vpop.f32.mrb[0].mxu0
  %v685 = vadd.f32 %v581, %v684
  %v686 = vpop.f32.mrb[0].mxu0
  %687 = vmatprep.mubr.bf16.mxu0 0
  %688 = vmatmul.mubr.bf16.gmra.mrb[0].mxu0 %v576
  %v689 = vpop.f32.mrb[0].mxu0
  %v690 = vadd.f32 %v581, %v689
  %v691 = vpop.f32.mrb[0].mxu0
  %v692 = vpop.f32.mrb[0].mxu0
  %v693 = vadd.f32 %v581, %v692
  %v694 = vpop.f32.mrb[0].mxu0
  %695 = vdwg.mxu0
  %v696 = vtanh.pop %v666
  %v697 = vtanh.pop %v669
  %v698 = vtanh.pop %v674
  %v699 = vtanh.pop %v677
  %v700 = vtanh.pop %v682
  %v701 = vtanh.pop %v685
  %v702 = vtanh.pop %v690
  %v703 = vtanh.pop %v693
  %704 = vst [vmem:[%s3] sm:$0xff] %v696
  %705 = vst [vmem:[%s3 + $0x8] sm:$0xff] %v697
  %706 = vst [vmem:[%s3 + $0x10] sm:$0xff] %v698
  %707 = vst [vmem:[%s3 + $0x18] sm:$0xff] %v699
  %708 = vst [vmem:[%s3 + $0x20] sm:$0xff] %v700
  %709 = vst [vmem:[%s3 + $0x28] sm:$0xff] %v701
  %710 = vst [vmem:[%s3 + $0x30] sm:$0xff] %v702
  %711 = vst [vmem:[%s3 + $0x38] sm:$0xff] %v703
  // Predicated region
  $region14: #{fwd.1} parent=0 // pred_check
    _
  $region15: #{fwd.1} parent=0 // pred_check_branch
    %713 = sbr.rel (0) target = $region17
  $region16: #{fwd.1} parent=0 // pred_region
    _
  $region17: #{fwd.1} parent=0 // pred_fallthru
    _
  // Predicated region
  $region18: #{fwd.1} parent=0 // pred_check
    _
  $region19: #{fwd.1} parent=0 // pred_check_branch
    %715 = sbr.rel (0) target = $region21
  $region20: #{fwd.1} parent=0 // pred_region
    _
  $region21: #{fwd.1} parent=0 // pred_fallthru
    _

</llo_original>
